<compile_context>
chip_gen: v7x
topology: tpu7x:2x2x1
jax: 0.10.0
libtpu: 0.0.40
codegen_flags: <defaults>
</compile_context>

<pallas_src>
import math

import jax
import jax.numpy as jnp
from jax import lax
from jax.experimental import pallas as pl
from jax.experimental.pallas import tpu as pltpu


# ----------------------------------------------------------------------------
# PE table (same math as the PyTorch __init__ buffer)
# ----------------------------------------------------------------------------
def build_pe_table(seq_len: int, d_model: int) -> jnp.ndarray:
    """pe of shape (1, seq_len, d_model), float32."""
    position = jnp.arange(seq_len, dtype=jnp.float32)[:, None]                # (S, 1)
    div_term = jnp.exp(
        jnp.arange(0, d_model, 2, dtype=jnp.float32) * (-math.log(10000.0) / d_model)
    )                                                                          # (D/2,)
    ang = position * div_term                                                  # (S, D/2)
    pe = jnp.zeros((seq_len, d_model), dtype=jnp.float32)
    pe = pe.at[:, 0::2].set(jnp.sin(ang))
    pe = pe.at[:, 1::2].set(jnp.cos(ang))
    return pe[None, :, :]                                                      # (1, S, D)


# ----------------------------------------------------------------------------
# Counter-based hash (dropout mask), uint32, pure jnp ops
# ----------------------------------------------------------------------------
def _mix_u32(x):
    """Murmur3-style finalizer on uint32 values (arrays or scalars)."""
    x = x ^ (x >> 16)
    x = x * jnp.uint32(0x7FEB352D)
    x = x ^ (x >> 15)
    x = x * jnp.uint32(0x846CA68B)
    x = x ^ (x >> 16)
    return x


# ----------------------------------------------------------------------------
# Tiling helpers
# ----------------------------------------------------------------------------
def _fold_params(S: int, D: int):
    """Return (k, S_pad): fold k consecutive seq rows into the lane axis so
    k*D % 128 == 0 (lane-dense stores); pad S up to a multiple of k."""
    if D % 128 == 0:
        return 1, S
    kmin = 128 // math.gcd(D, 128)
    S_pad = ((S + kmin - 1) // kmin) * kmin
    if S_pad - S > S:            # padding would more than double the work
        return 1, S              # fallback: correct, just masked lane-tail stores
    return kmin, S_pad


def _pick_batch_tile(B: int, max_bt: int = 8) -> int:
    """Largest divisor of B that is <= max_bt."""
    bt = 1
    for c in range(1, min(B, max_bt) + 1):
        if B % c == 0:
            bt = c
    return bt


def _pick_row_tile(S2: int, D2: int, itemsize: int, budget_bytes: int,
                   row_multiple: int) -> int:
    """Largest divisor of S2 (multiple of row_multiple, else 8, else full S2)
    whose row-block fits budget_bytes."""
    if S2 * D2 * itemsize <= budget_bytes:
        return S2
    max_rows = max(1, budget_bytes // max(1, D2 * itemsize))
    for m in (row_multiple, 8):
        best = None
        cand = m
        upper = min(S2, max_rows)
        while cand <= upper:
            if S2 % cand == 0:
                best = cand
            cand += m
        if best is not None:
            return best
    return S2   # only legal fallback (full second-to-last dim)


def _vmem_config():
    """(per-block byte budget, vmem_limit_bytes), generation-aware."""
    try:
        info = pltpu.get_tpu_info()
        cap = getattr(info, "vmem_capacity_bytes", None)
    except Exception:
        cap = None
    if cap is not None and cap >= 96 * 1024 * 1024:       # v5e / v6e (128 MiB)
        return 8 * 1024 * 1024, 64 * 1024 * 1024
    return 4 * 1024 * 1024, 32 * 1024 * 1024              # v7x (64 MiB) / unknown


# ----------------------------------------------------------------------------
# Module wrapper (JAX/Pallas equivalent of the PyTorch PE module)
# ----------------------------------------------------------------------------
class PEPallas:
    def __init__(self, d_model: int, seq_len: int, dropout: float):
        self.d_model = d_model
        self.seq_len = seq_len
        self.dropout_p = float(dropout)
        self.pe_f32 = build_pe_table(seq_len, d_model)   # (1, seq_len, d_model) f32
        self._fwd_cache = {}                             # (B, S, dtype, training)

    def __call__(self, x: jnp.ndarray, *, training: bool = False,
                 seed: int = 0) -> jnp.ndarray:
        B, S, D = x.shape
        assert D == self.d_model and S <= self.seq_len
        key = (B, S, str(x.dtype), bool(training))
        if key not in self._fwd_cache:
            self._fwd_cache[key] = self._build(B, S, x.dtype, bool(training))
        fwd, pe_slab = self._fwd_cache[key]
        seed_arr = jnp.asarray([seed], dtype=jnp.int32)
        return fwd(x, pe_slab, seed_arr)

    # ------------------------------------------------------------------
    def _build(self, B: int, S: int, dtype, training: bool):
        D = self.d_model
        itemsize = jnp.dtype(dtype).itemsize

        k, S_pad = _fold_params(S, D)
        S2, D2 = S_pad // k, D * k

        budget, vmem_limit = _vmem_config()
        Bt = _pick_batch_tile(B)
        row_multiple = 8 * max(1, 4 // itemsize)          # 8 f32 / 16 bf16 / 32 i8
        TS = _pick_row_tile(S2, D2, itemsize, budget // Bt, row_multiple)
        n_s, n_b = S2 // TS, B // Bt

        # PE slab: f32 (parity with PyTorch promotion), lane-folded like x.
        pe2d = self.pe_f32[0]                             # (seq_len, D) f32
        rows = min(S_pad, self.seq_len)
        pe_slice = pe2d[:rows]
        if S_pad > rows:
            pe_slice = jnp.pad(pe_slice, ((0, S_pad - rows), (0, 0)))
        pe_slab = pe_slice.reshape(1, S2, D2).astype(jnp.float32)

        apply_dropout = training and self.dropout_p > 0.0
        inv_keep = 1.0 / (1.0 - self.dropout_p) if self.dropout_p < 1.0 else 0.0
        # drop iff hash_bits(23) < p * 2^23
        drop_threshold = min(1 << 23, int(round(self.dropout_p * (1 << 23))))

        def kernel(seed_ref, x_ref, pe_ref, o_ref):
            # x_ref/o_ref: (Bt, TS, D2) in activation dtype; pe_ref: (1, TS, D2) f32.
            y = x_ref[...].astype(jnp.float32) + pe_ref[...]
            if apply_dropout:
                shp = (Bt, TS, D2)
                b0 = pl.program_id(1) * Bt
                s0 = pl.program_id(0) * TS
                bi = lax.broadcasted_iota(jnp.int32, shp, 0) + b0
                si = lax.broadcasted_iota(jnp.int32, shp, 1) + s0
                di = lax.broadcasted_iota(jnp.int32, shp, 2)
                gidx = (bi * S2 + si) * D2 + di            # global element index
                g = gidx.astype(jnp.uint32)
                sd = seed_ref[0].astype(jnp.uint32) * jnp.uint32(0x9E3779B1)
                h = _mix_u32(g ^ sd)
                r = h & jnp.uint32(0x7FFFFF)               # 23 uniform bits
                keep = r >= jnp.uint32(drop_threshold)
                y = jnp.where(keep, y * jnp.float32(inv_keep), jnp.float32(0.0))
            o_ref[...] = y.astype(o_ref.dtype)

        # Make sure the chosen tiles (2x double-buffered x + out, pe) fit the limit.
        x_block = Bt * TS * D2 * itemsize
        pe_block = TS * D2 * 4
        needed = 2 * (2 * x_block + pe_block) + (2 << 20)
        vmem_limit = min(128 << 20, max(vmem_limit, needed))

        call = pl.pallas_call(
            kernel,
            out_shape=jax.ShapeDtypeStruct((B, S2, D2), dtype),
            grid_spec=pltpu.PrefetchScalarGridSpec(
                num_scalar_prefetch=1,                     # seed lands in SMEM
                grid=(n_s, n_b),                           # batch innermost -> PE resident
                in_specs=[
                    pl.BlockSpec((Bt, TS, D2), lambda s, b, seed: (b, s, 0)),  # x
                    pl.BlockSpec((1, TS, D2), lambda s, b, seed: (0, s, 0)),   # pe
                ],
                out_specs=pl.BlockSpec((Bt, TS, D2), lambda s, b, seed: (b, s, 0)),
            ),
            compiler_params=pltpu.CompilerParams(
                dimension_semantics=("parallel", "arbitrary"),  # s-axis megacore-sharded
                vmem_limit_bytes=vmem_limit,
            ),
        )

        def fwd(x, pe, seed_arr):
            xp = x
            if S_pad != S:
                xp = jnp.pad(xp, ((0, 0), (0, S_pad - S), (0, 0)))
            x2 = xp.reshape(B, S2, D2)
            o2 = call(seed_arr, x2, pe)
            out = o2.reshape(B, S_pad, D)
            if S_pad != S:
                out = out[:, :S, :]
            return out

        return jax.jit(fwd), pe_slab


# ----------------------------------------------------------------------------
# Self-test
# ----------------------------------------------------------------------------
if __name__ == "__main__":
    d_model, seq_len, dropout_p = 32, 16, 0.1
    B, S = 2, 8                                          # S < seq_len exercises slicing

    key = jax.random.PRNGKey(0)
    x = jax.random.normal(key, (B, S, d_model), dtype=jnp.float32)

    module = PEPallas(d_model, seq_len, dropout_p)

    # --- eval mode (dropout is identity) -> exact reference check ---
    out_eval = jax.block_until_ready(module(x, training=False))
    ref = x + module.pe_f32[:, :S, :]
    assert out_eval.shape == (B, S, d_model)
    assert jnp.allclose(out_eval, ref, atol=1e-6, rtol=1e-6), "eval-mode mismatch"

    # --- training mode (inverted dropout via in-kernel counter-based hash) ---
    # TODO(synk): dropout mask is deterministic per (seed, element index), not
    # bit-identical to torch.nn.Dropout's RNG stream (same distribution).
    out_train = jax.block_until_ready(module(x, training=True, seed=1234))
    scaled = ref / (1.0 - dropout_p)
    is_zero = jnp.isclose(out_train, 0.0, atol=1e-6)
    is_kept = jnp.isclose(out_train, scaled, atol=1e-5, rtol=1e-5)
    assert bool(jnp.all(is_zero | is_kept)), "training-mode dropout mismatch"

    print("KERNEL_OK")
</pallas_src>

<mosaic_0001>
module attributes {stable_mosaic.version = 11 : i64} {
  func.func @kernel(%arg0: i32, %arg1: i32, %arg2: memref<1xi32, #tpu.memory_space<smem>>, %arg3: memref<2x2x128xf32, #tpu.memory_space<vmem>>, %arg4: memref<1x2x128xf32, #tpu.memory_space<vmem>>, %arg5: memref<2x2x128xf32, #tpu.memory_space<vmem>>) attributes {dimension_semantics = [#tpu.dimension_semantics<parallel>, #tpu.dimension_semantics<arbitrary>], iteration_bounds = array<i64: 1, 1>, scalar_prefetch = 1 : i64, scratch_operands = 0 : i64, tpu.core_type = #tpu.core_type<tc>, window_params = [{transform_indices = @transform_0, window_bounds = array<i64: 2, 2, 128>}, {transform_indices = @transform_1, window_bounds = array<i64: 1, 2, 128>}, {transform_indices = @transform_2, window_bounds = array<i64: 2, 2, 128>}]} {
    %c0 = arith.constant 0 : index
    %c0_0 = arith.constant 0 : index
    %c0_1 = arith.constant 0 : index
    %0 = vector.load %arg3[%c0, %c0_0, %c0_1] : memref<2x2x128xf32, #tpu.memory_space<vmem>>, vector<2x2x128xf32>
    %c0_2 = arith.constant 0 : index
    %c0_3 = arith.constant 0 : index
    %c0_4 = arith.constant 0 : index
    %1 = vector.load %arg4[%c0_2, %c0_3, %c0_4] : memref<1x2x128xf32, #tpu.memory_space<vmem>>, vector<1x2x128xf32>
    %2 = vector.broadcast %1 : vector<1x2x128xf32> to vector<2x2x128xf32>
    %3 = arith.addf %0, %2 : vector<2x2x128xf32>
    %c0_5 = arith.constant 0 : index
    %c0_6 = arith.constant 0 : index
    %c0_7 = arith.constant 0 : index
    %4 = vector.load %arg5[%c0_5, %c0_6, %c0_7] : memref<2x2x128xf32, #tpu.memory_space<vmem>>, vector<2x2x128xf32>
    tpu.vector_store %arg5[%c0_5, %c0_6, %c0_7], %3 {strides = array<i32>} : memref<2x2x128xf32, #tpu.memory_space<vmem>>, vector<2x2x128xf32>,
    return
  }
  func.func @transform_0(%arg0: i32, %arg1: i32, %arg2: memref<1xi32, #tpu.memory_space<smem>>) -> (i32, i32, i32) {
    %c0_i32 = arith.constant 0 : i32
    %c0_i32_0 = arith.constant 0 : i32
    return %arg1, %arg0, %c0_i32 : i32, i32, i32
  }
  func.func @transform_1(%arg0: i32, %arg1: i32, %arg2: memref<1xi32, #tpu.memory_space<smem>>) -> (i32, i32, i32) {
    %c0_i32 = arith.constant 0 : i32
    %c0_i32_0 = arith.constant 0 : i32
    %c0_i32_1 = arith.constant 0 : i32
    return %c0_i32, %arg0, %c0_i32_0 : i32, i32, i32
  }
  func.func @transform_2(%arg0: i32, %arg1: i32, %arg2: memref<1xi32, #tpu.memory_space<smem>>) -> (i32, i32, i32) {
    %c0_i32 = arith.constant 0 : i32
    %c0_i32_0 = arith.constant 0 : i32
    return %arg1, %arg0, %c0_i32 : i32, i32, i32
  }
}

</mosaic_0001>

<llo_original>
// kernel: fwd.1
$region0: #{fwd.1}
  #allocation0 [shape = 'u32[]', space=smem, size = 0x4, offset = 0x4, fixed_abs, tag = 'smem constant byte address 0x4 - core index']
  #allocation1 [shape = 'u32[144,128]{1,0:T(1,128)}', space=vmem, size = 0x12000, scoped, tag = 'internal scratch']
  #allocation2 [shape = 's32[1]{0}', space=sflag, size = 0x4, scoped, tag = 'scoped memory for fwd.1']
  #allocation3 [shape = 's32[1]{0:T(128)S(6)}', space=smem, size = 0x200, scoped, tag = 'prefetched SMEM operand 0']
  %s0 = inlined_call_operand.<no memory space> [shape: s32[1], index: 0, kind: input, shape index: {}]
  %s1 = inlined_call_operand.vmem [shape: f32[2,2,128], index: 1, kind: input, shape index: {}]
  %s2 = inlined_call_operand.vmem [shape: f32[1,2,128], index: 2, kind: input, shape index: {}]
  %s3 = inlined_call_operand.vmem [shape: f32[2,2,128], index: 3, kind: output, shape index: {}]
  %s4 = sld [smem:[#allocation0]]
  $region18: #{fwd.1} parent=0
    _
  %s6 = ssub.s32 1, %s4
  %s7 = scalar_select 0, %s6, %s4
  %8 = sst [smem:[#allocation3]] %s0
  // Predicated region
  $region2: #{fwd.1} parent=0 // pred_check
    _
  $region3: #{fwd.1} parent=0 // pred_check_branch
    %10 = sbr.rel (0) target = $region5
  $region4: #{fwd.1} parent=0 // pred_region
    _
  $region5: #{fwd.1} parent=0 // pred_fallthru
    _
  // Predicated region
  $region6: #{fwd.1} parent=0 // pred_check
    _
  $region7: #{fwd.1} parent=0 // pred_check_branch
    %12 = sbr.rel (0) target = $region9
  $region8: #{fwd.1} parent=0 // pred_region
    _
  $region9: #{fwd.1} parent=0 // pred_fallthru
    _
  %v13 = vld [vmem:[%s1] sm:$0x3]
  %v14 = vld [vmem:[%s1 + $0x2] sm:$0x3]
  %v15 = vld [vmem:[%s2] sm:$0x3]
  %v16 = vadd.f32 %v13, %v15
  %v17 = vadd.f32 %v14, %v15
  %18 = vst [vmem:[%s3] sm:$0x3] %v16
  %19 = vst [vmem:[%s3 + $0x2] sm:$0x3] %v17
  // Predicated region
  $region10: #{fwd.1} parent=0 // pred_check
    _
  $region11: #{fwd.1} parent=0 // pred_check_branch
    %21 = sbr.rel (0) target = $region13
  $region12: #{fwd.1} parent=0 // pred_region
    _
  $region13: #{fwd.1} parent=0 // pred_fallthru
    _
  // Predicated region
  $region14: #{fwd.1} parent=0 // pred_check
    _
  $region15: #{fwd.1} parent=0 // pred_check_branch
    %23 = sbr.rel (0) target = $region17
  $region16: #{fwd.1} parent=0 // pred_region
    _
  $region17: #{fwd.1} parent=0 // pred_fallthru
    _

</llo_original>
